<compile_context>
chip_gen: v7x
topology: tpu7x:2x2x1
jax: 0.10.0
libtpu: 0.0.40
codegen_flags: <defaults>
</compile_context>

<pallas_src>
import numpy as np
import jax
import jax.numpy as jnp
from jax import lax
from jax.experimental import pallas as pl
from jax.experimental.pallas import tpu as pltpu


# ----------------------------------------------------------------------------- kernel
def _resblock_kernel(xp_ref, b1w_ref, b1b_ref, b2w_ref, sw_ref, pv_ref, bias_ref,
                     out_ref, y1p_ref):
    # xp_ref  : (1, H+2, (W+2)*Cin)        zero-padded input rows, (w,ci) flattened, f32
    # b1w_ref : (3, (W+2)*Cin, (W+2)*Cin)  conv1 band matrix per vertical tap (bf16)
    # b1b_ref : (1, (W+2)*Cin)             conv1 bias, zero on pad columns (f32)
    # b2w_ref : (3, (W+2)*Cin, (W//2)*Cout) conv2 bands fused with width-pool*0.25 (bf16)
    # sw_ref  : ((W+2)*Cin, (W//2)*Cout)   shortcut width-pool*0.25 + 1x1 conv (bf16)
    # pv_ref  : (H//2, H)                  vertical pair-sum matrix (ones, f32)
    # bias_ref: (1, (W//2)*Cout)           b2 + bs tiled over W//2 (f32)
    # out_ref : (1, H//2, (W//2)*Cout)
    # y1p_ref : (H+2, (W++2)*Cin) f32 VMEM scratch: zero-padded ReLU(conv1) rows
    f32 = jnp.float32
    cd = b1w_ref.dtype                      # MXU compute dtype (bf16 by default)
    Hp = xp_ref.shape[1]
    H = Hp - 2
    WCp = xp_ref.shape[2]

    xp = xp_ref[0]                          # (H+2, (W+2)*Cin), f32
    rx = jnp.maximum(xp, 0.0)               # ReLU(x)

    # ---- conv1 (3x3): three whole-image band matmuls, f32 accumulation ----
    acc1 = jnp.dot(rx[0:H, :].astype(cd), b1w_ref[0], preferred_element_type=f32)
    acc1 += jnp.dot(rx[1:H + 1, :].astype(cd), b1w_ref[1], preferred_element_type=f32)
    acc1 += jnp.dot(rx[2:H + 2, :].astype(cd), b1w_ref[2], preferred_element_type=f32)
    y1 = jnp.maximum(acc1 + b1b_ref[...], 0.0)        # (H, (W+2)*Cin); pad cols stay 0

    # ---- stash zero-padded ReLU(conv1) rows (borders zeroed once, sliced store) ----
    zrow = jnp.zeros((1, WCp), y1p_ref.dtype)
    y1p_ref[pl.ds(0, 1), :] = zrow
    y1p_ref[pl.ds(Hp - 1, 1), :] = zrow
    y1p_ref[pl.ds(1, H), :] = y1

    # ---- conv2 (3x3) fused with width-pool*0.25: three band matmuls ----
    y1p = y1p_ref[...]
    acc2 = jnp.dot(y1p[0:H, :].astype(cd), b2w_ref[0], preferred_element_type=f32)
    acc2 += jnp.dot(y1p[1:H + 1, :].astype(cd), b2w_ref[1], preferred_element_type=f32)
    acc2 += jnp.dot(y1p[2:H + 2, :].astype(cd), b2w_ref[2], preferred_element_type=f32)

    # ---- shortcut: width-pool*0.25 + 1x1 conv, one matmul on the raw input rows ----
    acc2 += jnp.dot(xp[1:H + 1, :].astype(cd), sw_ref[...], preferred_element_type=f32)

    # ---- vertical pair-sum completes both 2x2 average pools; add (b2+bs) once ----
    pooled = jnp.dot(pv_ref[...], acc2, preferred_element_type=f32)   # (H//2, (W//2)*Cout)
    out_ref[0] = (pooled + bias_ref[...]).astype(out_ref.dtype)


# ------------------------------------------------------------------- weight lowering
def _conv1_band_weights(w1, b1, W):
    """3x3 Conv2d(Cin->Cin, pad=1) as per-dh band matrices on padded flat rows."""
    Co, Ci = w1.shape[0], w1.shape[1]
    k_in, k_out = (W + 2) * Ci, (W + 2) * Co
    w_i = np.arange(W)[:, None, None, None]
    dw_i = np.arange(3)[None, :, None, None]
    ci_i = np.arange(Ci)[None, None, :, None]
    co_i = np.arange(Co)[None, None, None, :]
    rows = (w_i + dw_i) * Ci + ci_i                   # padded input flat column
    cols = (w_i + 1) * Co + co_i                      # padded output flat column
    rows, cols = np.broadcast_arrays(rows, cols)      # (W, 3, Ci, Co)
    bands = []
    for dh in range(3):
        vals = jnp.broadcast_to(jnp.transpose(w1[:, :, dh, :], (2, 1, 0))[None],
                                (W, 3, Ci, Co))       # [w, dw, ci, co]
        bands.append(jnp.zeros((k_in, k_out), jnp.float32)
                     .at[rows.ravel(), cols.ravel()].add(vals.reshape(-1)))
    b_cols = ((np.arange(W) + 1)[:, None] * Co + np.arange(Co)[None, :]).ravel()
    b1p = jnp.zeros((k_out,), jnp.float32).at[b_cols].set(jnp.tile(b1, W))
    return jnp.stack(bands), b1p.reshape(1, k_out)


def _conv2_pool_band_weights(w2, W):
    """3x3 Conv2d(Cin->Cout, pad=1) fused with the width half of AvgPool2d(2,2)
    (and the full 0.25 factor): padded flat rows in, (W//2)*Cout columns out."""
    Co, Ci = w2.shape[0], w2.shape[1]
    k_in, k_out = (W + 2) * Ci, (W // 2) * Co
    w_i = np.arange(W)[:, None, None, None]
    dw_i = np.arange(3)[None, :, None, None]
    ci_i = np.arange(Ci)[None, None, :, None]
    co_i = np.arange(Co)[None, None, None, :]
    rows = (w_i + dw_i) * Ci + ci_i
    cols = (w_i // 2) * Co + co_i
    rows, cols = np.broadcast_arrays(rows, cols)
    bands = []
    for dh in range(3):
        vals = 0.25 * jnp.broadcast_to(jnp.transpose(w2[:, :, dh, :], (2, 1, 0))[None],
                                       (W, 3, Ci, Co))
        bands.append(jnp.zeros((k_in, k_out), jnp.float32)
                     .at[rows.ravel(), cols.ravel()].add(vals.reshape(-1)))
    return jnp.stack(bands)


def _shortcut_pool_weights(ws, W):
    """Width half of AvgPool2d(2,2) (x0.25) fused with the 1x1 shortcut conv."""
    Co, Ci = ws.shape[0], ws.shape[1]
    k_in, k_out = (W + 2) * Ci, (W // 2) * Co
    w_i = np.arange(W)[:, None, None]
    ci_i = np.arange(Ci)[None, :, None]
    co_i = np.arange(Co)[None, None, :]
    rows = (w_i + 1) * Ci + ci_i
    cols = (w_i // 2) * Co + co_i
    rows, cols = np.broadcast_arrays(rows, cols)
    vals = 0.25 * jnp.broadcast_to(jnp.transpose(ws[:, :, 0, 0], (1, 0))[None],
                                   (W, Ci, Co))
    return (jnp.zeros((k_in, k_out), jnp.float32)
            .at[rows.ravel(), cols.ravel()].add(vals.reshape(-1)))


# ------------------------------------------------------------------------- wrapper
def resblock_forward(x_nchw, params, *, compute_dtype=jnp.bfloat16):
    """ResBlock forward. x_nchw: (N, Cin, H, W) -> (N, Cout, H//2, W//2) float32."""
    N, C_in, H, W = x_nchw.shape
    assert H % 2 == 0 and W % 2 == 0
    w1, b1 = params["w1"], params["b1"]
    w2, b2 = params["w2"], params["b2"]
    ws, bs = params["ws"], params["bs"]
    C_out = w2.shape[0]

    WCp = (W + 2) * C_in            # padded flat row length (input / conv1 activations)
    WCq = (W // 2) * C_out          # pooled flat row length (output)

    # NCHW -> NHWC -> zero-pad spatial by 1 -> flatten (w, ci) into one lane-dense dim
    x_nhwc = jnp.transpose(x_nchw, (0, 2, 3, 1)).astype(jnp.float32)
    xp = jnp.pad(x_nhwc, ((0, 0), (1, 1), (1, 1), (0, 0)))
    xp_flat = xp.reshape(N, H + 2, WCp)

    # static-weight lowering (wrapper-side layout plumbing, done once per call)
    b1w, b1b = _conv1_band_weights(w1, b1, W)
    b2w = _conv2_pool_band_weights(w2, W)
    sw = _shortcut_pool_weights(ws, W)
    b1w = b1w.astype(compute_dtype)
    b2w = b2w.astype(compute_dtype)
    sw = sw.astype(compute_dtype)

    pv = np.zeros((H // 2, H), np.float32)
    pv[np.arange(H // 2), 2 * np.arange(H // 2)] = 1.0
    pv[np.arange(H // 2), 2 * np.arange(H // 2) + 1] = 1.0
    pv = jnp.asarray(pv)

    bias = jnp.tile(b2.astype(jnp.float32) + bs.astype(jnp.float32), W // 2)
    bias = bias.reshape(1, WCq)

    grid_spec = pltpu.PrefetchScalarGridSpec(
        num_scalar_prefetch=0,
        grid=(N,),                                    # one image per step, >=2 steps
        in_specs=[
            pl.BlockSpec((1, H + 2, WCp), lambda b: (b, 0, 0)),
            pl.BlockSpec((3, WCp, WCp), lambda b: (0, 0, 0)),
            pl.BlockSpec((1, WCp), lambda b: (0, 0)),
            pl.BlockSpec((3, WCp, WCq), lambda b: (0, 0, 0)),
            pl.BlockSpec((WCp, WCq), lambda b: (0, 0)),
            pl.BlockSpec((H // 2, H), lambda b: (0, 0)),
            pl.BlockSpec((1, WCq), lambda b: (0, 0)),
        ],
        out_specs=pl.BlockSpec((1, H // 2, WCq), lambda b: (b, 0, 0)),
        scratch_shapes=[pltpu.VMEM((H + 2, WCp), jnp.float32)],
    )

    out_flat = pl.pallas_call(
        _resblock_kernel,
        out_shape=jax.ShapeDtypeStruct((N, H // 2, WCq), jnp.float32),
        grid_spec=grid_spec,
        compiler_params=pltpu.CompilerParams(dimension_semantics=("parallel",)),
    )(xp_flat, b1w, b1b, b2w, sw, pv, bias)

    out_nhwc = out_flat.reshape(N, H // 2, W // 2, C_out)
    return jnp.transpose(out_nhwc, (0, 3, 1, 2))      # NHWC -> NCHW


# ---------------------------------------------------------------------- test helpers
def init_params(key, c_in, c_out):
    ks = jax.random.split(key, 6)
    s1 = 1.0 / np.sqrt(c_in * 9)
    ss = 1.0 / np.sqrt(c_in)
    return dict(
        w1=jax.random.uniform(ks[0], (c_in, c_in, 3, 3), jnp.float32, -s1, s1),
        b1=jax.random.uniform(ks[1], (c_in,), jnp.float32, -s1, s1),
        w2=jax.random.uniform(ks[2], (c_out, c_in, 3, 3), jnp.float32, -s1, s1),
        b2=jax.random.uniform(ks[3], (c_out,), jnp.float32, -s1, s1),
        ws=jax.random.uniform(ks[4], (c_out, c_in, 1, 1), jnp.float32, -ss, ss),
        bs=jax.random.uniform(ks[5], (c_out,), jnp.float32, -ss, ss),
    )


def reference_forward(x, p):
    """Pure-JAX (XLA) reference, NCHW like the PyTorch module."""
    dn = ("NCHW", "OIHW", "NCHW")

    def conv(v, w, pad):
        return lax.conv_general_dilated(v, w, (1, 1), ((pad, pad), (pad, pad)),
                                        dimension_numbers=dn)

    def avgpool2(v):
        return lax.reduce_window(v, 0.0, lax.add,
                                 (1, 1, 2, 2), (1, 1, 2, 2), "VALID") * 0.25

    r = jnp.maximum(x, 0.0)
    y1 = conv(r, p["w1"], 1) + p["b1"][None, :, None, None]
    r2 = jnp.maximum(y1, 0.0)
    y2 = conv(r2, p["w2"], 1) + p["b2"][None, :, None, None]
    conv_path = avgpool2(y2)
    sc = conv(avgpool2(x), p["ws"], 0) + p["bs"][None, :, None, None]
    return conv_path + sc


if __name__ == "__main__":
    N, C_in, C_out, H, W = 2, 4, 8, 16, 16
    key = jax.random.PRNGKey(0)
    kx, kp = jax.random.split(key)
    x = jax.random.normal(kx, (N, C_in, H, W), jnp.float32)
    params = init_params(kp, C_in, C_out)

    out = jax.block_until_ready(resblock_forward(x, params))
    ref = jax.block_until_ready(reference_forward(x, params))

    assert out.shape == (N, C_out, H // 2, W // 2), out.shape
    # bf16 MXU operands with f32 accumulation -> looser tolerance than pure f32
    if not np.allclose(np.asarray(out), np.asarray(ref), atol=3e-2, rtol=3e-2):
        err = float(jnp.max(jnp.abs(out - ref)))
        raise AssertionError(f"Pallas ResBlock mismatch vs reference, max abs err={err}")
    print("KERNEL_OK")
</pallas_src>

<mosaic_0001>
module attributes {stable_mosaic.version = 11 : i64} {
  func.func @_resblock_kernel(%arg0: i32, %arg1: memref<1x18x72xf32, #tpu.memory_space<vmem>>, %arg2: memref<3x72x72xbf16, #tpu.memory_space<vmem>>, %arg3: memref<1x72xf32, #tpu.memory_space<vmem>>, %arg4: memref<3x72x64xbf16, #tpu.memory_space<vmem>>, %arg5: memref<72x64xbf16, #tpu.memory_space<vmem>>, %arg6: memref<8x16xf32, #tpu.memory_space<vmem>>, %arg7: memref<1x64xf32, #tpu.memory_space<vmem>>, %arg8: memref<1x8x64xf32, #tpu.memory_space<vmem>>, %arg9: memref<18x72xf32, #tpu.memory_space<vmem>>) attributes {dimension_semantics = [#tpu.dimension_semantics<parallel>], iteration_bounds = array<i64: 2>, scalar_prefetch = 0 : i64, scratch_operands = 1 : i64, tpu.core_type = #tpu.core_type<tc>, window_params = [{transform_indices = @transform_0, window_bounds = array<i64: 1, 18, 72>}, {pipeline_mode = #tpu.pipeline_mode<synchronous>, transform_indices = @transform_1, window_bounds = array<i64: 3, 72, 72>}, {pipeline_mode = #tpu.pipeline_mode<synchronous>, transform_indices = @transform_2, window_bounds = array<i64: 1, 72>}, {pipeline_mode = #tpu.pipeline_mode<synchronous>, transform_indices = @transform_3, window_bounds = array<i64: 3, 72, 64>}, {pipeline_mode = #tpu.pipeline_mode<synchronous>, transform_indices = @transform_4, window_bounds = array<i64: 72, 64>}, {pipeline_mode = #tpu.pipeline_mode<synchronous>, transform_indices = @transform_5, window_bounds = array<i64: 8, 16>}, {pipeline_mode = #tpu.pipeline_mode<synchronous>, transform_indices = @transform_6, window_bounds = array<i64: 1, 64>}, {transform_indices = @transform_7, window_bounds = array<i64: 1, 8, 64>}]} {
    %c0 = arith.constant 0 : index
    %c0_0 = arith.constant 0 : index
    %c0_1 = arith.constant 0 : index
    %0 = vector.load %arg1[%c0, %c0_0, %c0_1] : memref<1x18x72xf32, #tpu.memory_space<vmem>>, vector<1x18x72xf32>
    %1 = vector.shape_cast %0 : vector<1x18x72xf32> to vector<18x72xf32>
    %cst = arith.constant 0.000000e+00 : f32
    %2 = vector.broadcast %cst : f32 to vector<18x72xf32>
    %3 = arith.maximumf %1, %2 : vector<18x72xf32>
    %4 = vector.extract_strided_slice %3 {offsets = [0, 0], sizes = [16, 72], strides = [1, 1]} : vector<18x72xf32> to vector<16x72xf32>
    %5 = arith.truncf %4 : vector<16x72xf32> to vector<16x72xbf16>
    %c0_2 = arith.constant 0 : index
    %c0_3 = arith.constant 0 : index
    %c0_4 = arith.constant 0 : index
    %6 = vector.load %arg2[%c0_2, %c0_3, %c0_4] : memref<3x72x72xbf16, #tpu.memory_space<vmem>>, vector<1x72x72xbf16>
    %7 = vector.shape_cast %6 : vector<1x72x72xbf16> to vector<72x72xbf16>
    %cst_5 = arith.constant dense<0.000000e+00> : vector<16x72xf32>
    %8 = tpu.matmul %5, %7, %cst_5 {dimension_numbers = #tpu.dot_dimension_numbers<[1], [0], [0], [1], [0, 0, 1, 1], [], []>} : vector<16x72xbf16>, vector<72x72xbf16>, vector<16x72xf32> -> vector<16x72xf32>
    %9 = vector.extract_strided_slice %3 {offsets = [1, 0], sizes = [16, 72], strides = [1, 1]} : vector<18x72xf32> to vector<16x72xf32>
    %10 = arith.truncf %9 : vector<16x72xf32> to vector<16x72xbf16>
    %c1 = arith.constant 1 : index
    %c0_6 = arith.constant 0 : index
    %c0_7 = arith.constant 0 : index
    %11 = vector.load %arg2[%c1, %c0_6, %c0_7] : memref<3x72x72xbf16, #tpu.memory_space<vmem>>, vector<1x72x72xbf16>
    %12 = vector.shape_cast %11 : vector<1x72x72xbf16> to vector<72x72xbf16>
    %cst_8 = arith.constant dense<0.000000e+00> : vector<16x72xf32>
    %13 = tpu.matmul %10, %12, %cst_8 {dimension_numbers = #tpu.dot_dimension_numbers<[1], [0], [0], [1], [0, 0, 1, 1], [], []>} : vector<16x72xbf16>, vector<72x72xbf16>, vector<16x72xf32> -> vector<16x72xf32>
    %14 = arith.addf %8, %13 : vector<16x72xf32>
    %15 = vector.extract_strided_slice %3 {offsets = [2, 0], sizes = [16, 72], strides = [1, 1]} : vector<18x72xf32> to vector<16x72xf32>
    %16 = arith.truncf %15 : vector<16x72xf32> to vector<16x72xbf16>
    %c2 = arith.constant 2 : index
    %c0_9 = arith.constant 0 : index
    %c0_10 = arith.constant 0 : index
    %17 = vector.load %arg2[%c2, %c0_9, %c0_10] : memref<3x72x72xbf16, #tpu.memory_space<vmem>>, vector<1x72x72xbf16>
    %18 = vector.shape_cast %17 : vector<1x72x72xbf16> to vector<72x72xbf16>
    %cst_11 = arith.constant dense<0.000000e+00> : vector<16x72xf32>
    %19 = tpu.matmul %16, %18, %cst_11 {dimension_numbers = #tpu.dot_dimension_numbers<[1], [0], [0], [1], [0, 0, 1, 1], [], []>} : vector<16x72xbf16>, vector<72x72xbf16>, vector<16x72xf32> -> vector<16x72xf32>
    %20 = arith.addf %14, %19 : vector<16x72xf32>
    %c0_12 = arith.constant 0 : index
    %c0_13 = arith.constant 0 : index
    %21 = vector.load %arg3[%c0_12, %c0_13] : memref<1x72xf32, #tpu.memory_space<vmem>>, vector<1x72xf32>
    %22 = vector.broadcast %21 : vector<1x72xf32> to vector<16x72xf32>
    %23 = arith.addf %20, %22 : vector<16x72xf32>
    %cst_14 = arith.constant 0.000000e+00 : f32
    %24 = vector.broadcast %cst_14 : f32 to vector<16x72xf32>
    %25 = arith.maximumf %23, %24 : vector<16x72xf32>
    %cst_15 = arith.constant 0.000000e+00 : f32
    %26 = vector.broadcast %cst_15 : f32 to vector<1x72xf32>
    %c0_16 = arith.constant 0 : index
    %c0_17 = arith.constant 0 : index
    %27 = vector.load %arg9[%c0_16, %c0_17] : memref<18x72xf32, #tpu.memory_space<vmem>>, vector<1x72xf32>
    tpu.vector_store %arg9[%c0_16, %c0_17], %26 {strides = array<i32>} : memref<18x72xf32, #tpu.memory_space<vmem>>, vector<1x72xf32>,
    %c17 = arith.constant 17 : index
    %c0_18 = arith.constant 0 : index
    %28 = vector.load %arg9[%c17, %c0_18] : memref<18x72xf32, #tpu.memory_space<vmem>>, vector<1x72xf32>
    tpu.vector_store %arg9[%c17, %c0_18], %26 {strides = array<i32>} : memref<18x72xf32, #tpu.memory_space<vmem>>, vector<1x72xf32>,
    %c1_19 = arith.constant 1 : index
    %c0_20 = arith.constant 0 : index
    %29 = vector.load %arg9[%c1_19, %c0_20] : memref<18x72xf32, #tpu.memory_space<vmem>>, vector<16x72xf32>
    tpu.vector_store %arg9[%c1_19, %c0_20], %25 {strides = array<i32>} : memref<18x72xf32, #tpu.memory_space<vmem>>, vector<16x72xf32>,
    %c0_21 = arith.constant 0 : index
    %c0_22 = arith.constant 0 : index
    %30 = vector.load %arg9[%c0_21, %c0_22] : memref<18x72xf32, #tpu.memory_space<vmem>>, vector<18x72xf32>
    %31 = vector.extract_strided_slice %30 {offsets = [0, 0], sizes = [16, 72], strides = [1, 1]} : vector<18x72xf32> to vector<16x72xf32>
    %32 = arith.truncf %31 : vector<16x72xf32> to vector<16x72xbf16>
    %c0_23 = arith.constant 0 : index
    %c0_24 = arith.constant 0 : index
    %c0_25 = arith.constant 0 : index
    %33 = vector.load %arg4[%c0_23, %c0_24, %c0_25] : memref<3x72x64xbf16, #tpu.memory_space<vmem>>, vector<1x72x64xbf16>
    %34 = vector.shape_cast %33 : vector<1x72x64xbf16> to vector<72x64xbf16>
    %cst_26 = arith.constant dense<0.000000e+00> : vector<16x64xf32>
    %35 = tpu.matmul %32, %34, %cst_26 {dimension_numbers = #tpu.dot_dimension_numbers<[1], [0], [0], [1], [0, 0, 1, 1], [], []>} : vector<16x72xbf16>, vector<72x64xbf16>, vector<16x64xf32> -> vector<16x64xf32>
    %36 = vector.extract_strided_slice %30 {offsets = [1, 0], sizes = [16, 72], strides = [1, 1]} : vector<18x72xf32> to vector<16x72xf32>
    %37 = arith.truncf %36 : vector<16x72xf32> to vector<16x72xbf16>
    %c1_27 = arith.constant 1 : index
    %c0_28 = arith.constant 0 : index
    %c0_29 = arith.constant 0 : index
    %38 = vector.load %arg4[%c1_27, %c0_28, %c0_29] : memref<3x72x64xbf16, #tpu.memory_space<vmem>>, vector<1x72x64xbf16>
    %39 = vector.shape_cast %38 : vector<1x72x64xbf16> to vector<72x64xbf16>
    %cst_30 = arith.constant dense<0.000000e+00> : vector<16x64xf32>
    %40 = tpu.matmul %37, %39, %cst_30 {dimension_numbers = #tpu.dot_dimension_numbers<[1], [0], [0], [1], [0, 0, 1, 1], [], []>} : vector<16x72xbf16>, vector<72x64xbf16>, vector<16x64xf32> -> vector<16x64xf32>
    %41 = arith.addf %35, %40 : vector<16x64xf32>
    %42 = vector.extract_strided_slice %30 {offsets = [2, 0], sizes = [16, 72], strides = [1, 1]} : vector<18x72xf32> to vector<16x72xf32>
    %43 = arith.truncf %42 : vector<16x72xf32> to vector<16x72xbf16>
    %c2_31 = arith.constant 2 : index
    %c0_32 = arith.constant 0 : index
    %c0_33 = arith.constant 0 : index
    %44 = vector.load %arg4[%c2_31, %c0_32, %c0_33] : memref<3x72x64xbf16, #tpu.memory_space<vmem>>, vector<1x72x64xbf16>
    %45 = vector.shape_cast %44 : vector<1x72x64xbf16> to vector<72x64xbf16>
    %cst_34 = arith.constant dense<0.000000e+00> : vector<16x64xf32>
    %46 = tpu.matmul %43, %45, %cst_34 {dimension_numbers = #tpu.dot_dimension_numbers<[1], [0], [0], [1], [0, 0, 1, 1], [], []>} : vector<16x72xbf16>, vector<72x64xbf16>, vector<16x64xf32> -> vector<16x64xf32>
    %47 = arith.addf %41, %46 : vector<16x64xf32>
    %48 = vector.extract_strided_slice %1 {offsets = [1, 0], sizes = [16, 72], strides = [1, 1]} : vector<18x72xf32> to vector<16x72xf32>
    %49 = arith.truncf %48 : vector<16x72xf32> to vector<16x72xbf16>
    %c0_35 = arith.constant 0 : index
    %c0_36 = arith.constant 0 : index
    %50 = vector.load %arg5[%c0_35, %c0_36] : memref<72x64xbf16, #tpu.memory_space<vmem>>, vector<72x64xbf16>
    %cst_37 = arith.constant dense<0.000000e+00> : vector<16x64xf32>
    %51 = tpu.matmul %49, %50, %cst_37 {dimension_numbers = #tpu.dot_dimension_numbers<[1], [0], [0], [1], [0, 0, 1, 1], [], []>} : vector<16x72xbf16>, vector<72x64xbf16>, vector<16x64xf32> -> vector<16x64xf32>
    %52 = arith.addf %47, %51 : vector<16x64xf32>
    %c0_38 = arith.constant 0 : index
    %c0_39 = arith.constant 0 : index
    %53 = vector.load %arg6[%c0_38, %c0_39] : memref<8x16xf32, #tpu.memory_space<vmem>>, vector<8x16xf32>
    %cst_40 = arith.constant dense<0.000000e+00> : vector<8x64xf32>
    %54 = tpu.matmul %53, %52, %cst_40 {dimension_numbers = #tpu.dot_dimension_numbers<[1], [0], [0], [1], [0, 0, 1, 1], [], []>} : vector<8x16xf32>, vector<16x64xf32>, vector<8x64xf32> -> vector<8x64xf32>
    %c0_41 = arith.constant 0 : index
    %c0_42 = arith.constant 0 : index
    %55 = vector.load %arg7[%c0_41, %c0_42] : memref<1x64xf32, #tpu.memory_space<vmem>>, vector<1x64xf32>
    %56 = vector.broadcast %55 : vector<1x64xf32> to vector<8x64xf32>
    %57 = arith.addf %54, %56 : vector<8x64xf32>
    %c0_43 = arith.constant 0 : index
    %c0_44 = arith.constant 0 : index
    %c0_45 = arith.constant 0 : index
    %58 = vector.load %arg8[%c0_43, %c0_44, %c0_45] : memref<1x8x64xf32, #tpu.memory_space<vmem>>, vector<1x8x64xf32>
    %59 = vector.shape_cast %58 : vector<1x8x64xf32> to vector<8x64xf32>
    %60 = vector.shape_cast %57 : vector<8x64xf32> to vector<1x8x64xf32>
    tpu.vector_store %arg8[%c0_43, %c0_44, %c0_45], %60 {strides = array<i32>} : memref<1x8x64xf32, #tpu.memory_space<vmem>>, vector<1x8x64xf32>,
    return
  }
  func.func @transform_0(%arg0: i32) -> (i32, i32, i32) {
    %c0_i32 = arith.constant 0 : i32
    %c0_i32_0 = arith.constant 0 : i32
    %c0_i32_1 = arith.constant 0 : i32
    return %arg0, %c0_i32, %c0_i32_0 : i32, i32, i32
  }
  func.func @transform_1(%arg0: i32) -> (i32, i32, i32) {
    %c0_i32 = arith.constant 0 : i32
    %c0_i32_0 = arith.constant 0 : i32
    %c0_i32_1 = arith.constant 0 : i32
    %c0_i32_2 = arith.constant 0 : i32
    return %c0_i32, %c0_i32_0, %c0_i32_1 : i32, i32, i32
  }
  func.func @transform_2(%arg0: i32) -> (i32, i32) {
    %c0_i32 = arith.constant 0 : i32
    %c0_i32_0 = arith.constant 0 : i32
    %c0_i32_1 = arith.constant 0 : i32
    return %c0_i32, %c0_i32_0 : i32, i32
  }
  func.func @transform_3(%arg0: i32) -> (i32, i32, i32) {
    %c0_i32 = arith.constant 0 : i32
    %c0_i32_0 = arith.constant 0 : i32
    %c0_i32_1 = arith.constant 0 : i32
    %c0_i32_2 = arith.constant 0 : i32
    return %c0_i32, %c0_i32_0, %c0_i32_1 : i32, i32, i32
  }
  func.func @transform_4(%arg0: i32) -> (i32, i32) {
    %c0_i32 = arith.constant 0 : i32
    %c0_i32_0 = arith.constant 0 : i32
    %c0_i32_1 = arith.constant 0 : i32
    return %c0_i32, %c0_i32_0 : i32, i32
  }
  func.func @transform_5(%arg0: i32) -> (i32, i32) {
    %c0_i32 = arith.constant 0 : i32
    %c0_i32_0 = arith.constant 0 : i32
    %c0_i32_1 = arith.constant 0 : i32
    return %c0_i32, %c0_i32_0 : i32, i32
  }
  func.func @transform_6(%arg0: i32) -> (i32, i32) {
    %c0_i32 = arith.constant 0 : i32
    %c0_i32_0 = arith.constant 0 : i32
    %c0_i32_1 = arith.constant 0 : i32
    return %c0_i32, %c0_i32_0 : i32, i32
  }
  func.func @transform_7(%arg0: i32) -> (i32, i32, i32) {
    %c0_i32 = arith.constant 0 : i32
    %c0_i32_0 = arith.constant 0 : i32
    %c0_i32_1 = arith.constant 0 : i32
    return %arg0, %c0_i32, %c0_i32_0 : i32, i32, i32
  }
}

</mosaic_0001>

<llo_original>
// kernel: tpu_custom_call.1
$region0: #{tpu_custom_call.1}
  #allocation0 [shape = 'u32[]', space=smem, size = 0x4, offset = 0x4, fixed_abs, tag = 'smem constant byte address 0x4 - core index']
  #allocation1 [shape = 'u32[144,128]{1,0:T(1,128)}', space=vmem, size = 0x12000, scoped, tag = 'internal scratch']
  #allocation2 [shape = 'f32[18,72]{1,0:T(8,128)}', space=vmem, size = 0x3000, scoped, tag = 'scratch operand']
  %s0 = inlined_call_operand.vmem [shape: f32[2,18,72], index: 0, kind: input, shape index: {}]
  %s1 = inlined_call_operand.vmem [shape: bf16[3,72,72], index: 1, kind: input, shape index: {}]
  %s2 = inlined_call_operand.vmem [shape: f32[1,72], index: 2, kind: input, shape index: {}]
  %s3 = inlined_call_operand.vmem [shape: bf16[3,72,64], index: 3, kind: input, shape index: {}]
  %s4 = inlined_call_operand.vmem [shape: bf16[72,64], index: 4, kind: input, shape index: {}]
  %s5 = inlined_call_operand.vmem [shape: f32[8,16], index: 5, kind: input, shape index: {}]
  %s6 = inlined_call_operand.vmem [shape: f32[1,64], index: 6, kind: input, shape index: {}]
  %s7 = inlined_call_operand.hbm [shape: f32[2,8,64], index: 7, kind: output, shape index: {}]
  %s8 = sld [smem:[#allocation0]]
  $region61: #{tpu_custom_call.1} parent=0
    _
  %s10 = ssub.s32 1, %s8
  %s11 = scalar_select 0, %s10, %s8
  $region1: #{tpu_custom_call.1} parent=0
    #allocation3 [shape = 'u8[8192]{0}', space=vmem, size = 0x2000, scoped, tag = 'output window, operand 0']
    #allocation4 [shape = 's32[2]{0}', space=sflag, size = 0x8, scoped, tag = 'scoped memory for tpu_custom_call.1']
    %12 = vsyncpa [#allocation4], 0
    %s13 = scalar_lea.sflag [#allocation4], 1
    %14 = vsyncpa %s13, 0
    loop: start=0, step=1, limit=4
    $region2: #{tpu_custom_call.1} parent=1 // loop_pre_header
      _
    $region3: #{tpu_custom_call.1} parent=1 // loop_header
      %s16 = sphi 0, %s20
      %p17 = scmp.ge.s32.totalorder %s16, 4
      %s26 = sphi 0, %s28
      %s29 = sphi 0, %s26
      %s30 = sphi 0, %s29
      %s46 = sphi 0, %s30
      %s50 = sphi 0, %s50
      %s52 = sphi 0, %s50
      %s53 = sphi 0, %s52
      %s67 = sphi 0, %s53
      %s71 = sphi 0, %s71
      %s73 = sphi 0, %s71
      %s74 = sphi 0, %s73
      %s88 = sphi 0, %s74
      %s92 = sphi 0, %s92
      %s94 = sphi 0, %s92
      %s95 = sphi 0, %s94
      %s109 = sphi 0, %s95
      %s113 = sphi 0, %s113
      %s115 = sphi 0, %s113
      %s116 = sphi 0, %s115
      %s130 = sphi 0, %s116
      %s134 = sphi 0, %s134
      %s136 = sphi 0, %s134
      %s137 = sphi 0, %s136
      %s151 = sphi 0, %s137
      %s155 = sphi 0, %s155
      %s157 = sphi 0, %s155
      %s158 = sphi 0, %s157
      %s172 = sphi 0, %s158
      %s178 = sphi 0, %s180
      %s181 = sphi 0, %s178
      %s182 = sphi 0, %s181
      %s198 = sphi 0, %s182
    $region4: #{tpu_custom_call.1} parent=1 // loop_header_branch
      %19 = sbr.rel (%p17) target = $region8
    $region5: #{tpu_custom_call.1} parent=1 // loop_body
      %s21 = ssub.s32 %s16, 1
      %s22 = ssub.s32 %s16, 2
      %s23 = sadd.s32 %s16, 1
      %s24 = ssub.s32 %s16, %s23
      %p25 = scmp.eq.s32.totalorder %s24, 0
      %s27 = sadd.s32 %s26, 1
      %s28 = scalar_select %p25, %s26, %s27
      %p31 = pneg %p25
      %p32 = scmp.eq.s32.totalorder %s16, 1
      %p33 = por %p31, %p32
      %p34 = scmp.ne.s32.totalorder %s26, %s29
      %p35 = scmp.eq.s32.totalorder %s16, 0
      %p36 = por %p34, %p35
      %p37 = scmp.ne.s32.totalorder %s26, %s29
      %p38 = scmp.eq.s32.totalorder %s21, 1
      %p39 = por %p37, %p38
      %p40 = scmp.ne.s32.totalorder %s29, %s30
      %p41 = scmp.eq.s32.totalorder %s21, 0
      %p42 = por %p40, %p41
      %p43 = scmp.ne.s32.totalorder %s29, %s30
      %p44 = scmp.eq.s32.totalorder %s22, 1
      %p45 = por %p43, %p44
      %p47 = scmp.ne.s32.totalorder %s30, %s46
      %p48 = scmp.eq.s32.totalorder %s22, 0
      %p49 = por %p47, %p48
      %s51 = sadd.s32 %s50, 1
      %p54 = scmp.eq.s32.totalorder %s16, 1
      %p55 = scmp.ne.s32.totalorder %s50, %s52
      %p56 = scmp.eq.s32.totalorder %s16, 0
      %p57 = por %p55, %p56
      %p58 = scmp.ne.s32.totalorder %s50, %s52
      %p59 = scmp.eq.s32.totalorder %s21, 1
      %p60 = por %p58, %p59
      %p61 = scmp.ne.s32.totalorder %s52, %s53
      %p62 = scmp.eq.s32.totalorder %s21, 0
      %p63 = por %p61, %p62
      %p64 = scmp.ne.s32.totalorder %s52, %s53
      %p65 = scmp.eq.s32.totalorder %s22, 1
      %p66 = por %p64, %p65
      %p68 = scmp.ne.s32.totalorder %s53, %s67
      %p69 = scmp.eq.s32.totalorder %s22, 0
      %p70 = por %p68, %p69
      %s72 = sadd.s32 %s71, 1
      %p75 = scmp.eq.s32.totalorder %s16, 1
      %p76 = scmp.ne.s32.totalorder %s71, %s73
      %p77 = scmp.eq.s32.totalorder %s16, 0
      %p78 = por %p76, %p77
      %p79 = scmp.ne.s32.totalorder %s71, %s73
      %p80 = scmp.eq.s32.totalorder %s21, 1
      %p81 = por %p79, %p80
      %p82 = scmp.ne.s32.totalorder %s73, %s74
      %p83 = scmp.eq.s32.totalorder %s21, 0
      %p84 = por %p82, %p83
      %p85 = scmp.ne.s32.totalorder %s73, %s74
      %p86 = scmp.eq.s32.totalorder %s22, 1
      %p87 = por %p85, %p86
      %p89 = scmp.ne.s32.totalorder %s74, %s88
      %p90 = scmp.eq.s32.totalorder %s22, 0
      %p91 = por %p89, %p90
      %s93 = sadd.s32 %s92, 1
      %p96 = scmp.eq.s32.totalorder %s16, 1
      %p97 = scmp.ne.s32.totalorder %s92, %s94
      %p98 = scmp.eq.s32.totalorder %s16, 0
      %p99 = por %p97, %p98
      %p100 = scmp.ne.s32.totalorder %s92, %s94
      %p101 = scmp.eq.s32.totalorder %s21, 1
      %p102 = por %p100, %p101
      %p103 = scmp.ne.s32.totalorder %s94, %s95
      %p104 = scmp.eq.s32.totalorder %s21, 0
      %p105 = por %p103, %p104
      %p106 = scmp.ne.s32.totalorder %s94, %s95
      %p107 = scmp.eq.s32.totalorder %s22, 1
      %p108 = por %p106, %p107
      %p110 = scmp.ne.s32.totalorder %s95, %s109
      %p111 = scmp.eq.s32.totalorder %s22, 0
      %p112 = por %p110, %p111
      %s114 = sadd.s32 %s113, 1
      %p117 = scmp.eq.s32.totalorder %s16, 1
      %p118 = scmp.ne.s32.totalorder %s113, %s115
      %p119 = scmp.eq.s32.totalorder %s16, 0
      %p120 = por %p118, %p119
      %p121 = scmp.ne.s32.totalorder %s113, %s115
      %p122 = scmp.eq.s32.totalorder %s21, 1
      %p123 = por %p121, %p122
      %p124 = scmp.ne.s32.totalorder %s115, %s116
      %p125 = scmp.eq.s32.totalorder %s21, 0
      %p126 = por %p124, %p125
      %p127 = scmp.ne.s32.totalorder %s115, %s116
      %p128 = scmp.eq.s32.totalorder %s22, 1
      %p129 = por %p127, %p128
      %p131 = scmp.ne.s32.totalorder %s116, %s130
      %p132 = scmp.eq.s32.totalorder %s22, 0
      %p133 = por %p131, %p132
      %s135 = sadd.s32 %s134, 1
      %p138 = scmp.eq.s32.totalorder %s16, 1
      %p139 = scmp.ne.s32.totalorder %s134, %s136
      %p140 = scmp.eq.s32.totalorder %s16, 0
      %p141 = por %p139, %p140
      %p142 = scmp.ne.s32.totalorder %s134, %s136
      %p143 = scmp.eq.s32.totalorder %s21, 1
      %p144 = por %p142, %p143
      %p145 = scmp.ne.s32.totalorder %s136, %s137
      %p146 = scmp.eq.s32.totalorder %s21, 0
      %p147 = por %p145, %p146
      %p148 = scmp.ne.s32.totalorder %s136, %s137
      %p149 = scmp.eq.s32.totalorder %s22, 1
      %p150 = por %p148, %p149
      %p152 = scmp.ne.s32.totalorder %s137, %s151
      %p153 = scmp.eq.s32.totalorder %s22, 0
      %p154 = por %p152, %p153
      %s156 = sadd.s32 %s155, 1
      %p159 = scmp.eq.s32.totalorder %s16, 1
      %p160 = scmp.ne.s32.totalorder %s155, %s157
      %p161 = scmp.eq.s32.totalorder %s16, 0
      %p162 = por %p160, %p161
      %p163 = scmp.ne.s32.totalorder %s155, %s157
      %p164 = scmp.eq.s32.totalorder %s21, 1
      %p165 = por %p163, %p164
      %p166 = scmp.ne.s32.totalorder %s157, %s158
      %p167 = scmp.eq.s32.totalorder %s21, 0
      %p168 = por %p166, %p167
      %p169 = scmp.ne.s32.totalorder %s157, %s158
      %p170 = scmp.eq.s32.totalorder %s22, 1
      %p171 = por %p169, %p170
      %p173 = scmp.ne.s32.totalorder %s158, %s172
      %p174 = scmp.eq.s32.totalorder %s22, 0
      %p175 = por %p173, %p174
      %s176 = ssub.s32 %s16, %s23
      %p177 = scmp.eq.s32.totalorder %s176, 0
      %s179 = sadd.s32 %s178, 1
      %s180 = scalar_select %p177, %s178, %s179
      %p183 = pneg %p177
      %p184 = scmp.eq.s32.totalorder %s16, 1
      %p185 = por %p183, %p184
      %p186 = scmp.ne.s32.totalorder %s178, %s181
      %p187 = scmp.eq.s32.totalorder %s16, 0
      %p188 = por %p186, %p187
      %p189 = scmp.ne.s32.totalorder %s178, %s181
      %p190 = scmp.eq.s32.totalorder %s21, 1
      %p191 = por %p189, %p190
      %p192 = scmp.ne.s32.totalorder %s181, %s182
      %p193 = scmp.eq.s32.totalorder %s21, 0
      %p194 = por %p192, %p193
      %p195 = scmp.ne.s32.totalorder %s181, %s182
      %p196 = scmp.eq.s32.totalorder %s22, 1
      %p197 = por %p195, %p196
      %p199 = scmp.ne.s32.totalorder %s182, %s198
      %p200 = scmp.eq.s32.totalorder %s22, 0
      %p201 = por %p199, %p200
      %p202 = scmp.le.s32.totalorder 1, %s16
      %p203 = scmp.lt.s32.totalorder %s16, 3
      %p204 = pnand %p202, %p203
      %p205 = pneg %p204
      // Predicated region
      $region9: #{tpu_custom_call.1} parent=5 // pred_check
        _
      $region10: #{tpu_custom_call.1} parent=5 // pred_check_branch
        %207 = sbr.rel (%p204) target = $region12
      $region11: #{tpu_custom_call.1} parent=5 // pred_region
        %s208 = ssub.s32 %s16, 1
        // Predicated region
        $region13: #{tpu_custom_call.1} parent=11 // pred_check
          %p209 = pneg %p63
        $region14: #{tpu_custom_call.1} parent=11 // pred_check_branch
          %211 = sbr.rel (%p209) target = $region16
        $region15: #{tpu_custom_call.1} parent=11 // pred_region
          _
        $region16: #{tpu_custom_call.1} parent=11 // pred_fallthru
          _
        // Predicated region
        $region17: #{tpu_custom_call.1} parent=11 // pred_check
          %p212 = pneg %p84
        $region18: #{tpu_custom_call.1} parent=11 // pred_check_branch
          %214 = sbr.rel (%p212) target = $region20
        $region19: #{tpu_custom_call.1} parent=11 // pred_region
          _
        $region20: #{tpu_custom_call.1} parent=11 // pred_fallthru
          _
        // Predicated region
        $region21: #{tpu_custom_call.1} parent=11 // pred_check
          %p215 = pneg %p105
        $region22: #{tpu_custom_call.1} parent=11 // pred_check_branch
          %217 = sbr.rel (%p215) target = $region24
        $region23: #{tpu_custom_call.1} parent=11 // pred_region
          _
        $region24: #{tpu_custom_call.1} parent=11 // pred_fallthru
          _
        // Predicated region
        $region25: #{tpu_custom_call.1} parent=11 // pred_check
          %p218 = pneg %p126
        $region26: #{tpu_custom_call.1} parent=11 // pred_check_branch
          %220 = sbr.rel (%p218) target = $region28
        $region27: #{tpu_custom_call.1} parent=11 // pred_region
          _
        $region28: #{tpu_custom_call.1} parent=11 // pred_fallthru
          _
        // Predicated region
        $region29: #{tpu_custom_call.1} parent=11 // pred_check
          %p221 = pneg %p147
        $region30: #{tpu_custom_call.1} parent=11 // pred_check_branch
          %223 = sbr.rel (%p221) target = $region32
        $region31: #{tpu_custom_call.1} parent=11 // pred_region
          _
        $region32: #{tpu_custom_call.1} parent=11 // pred_fallthru
          _
        // Predicated region
        $region33: #{tpu_custom_call.1} parent=11 // pred_check
          %p224 = pneg %p168
        $region34: #{tpu_custom_call.1} parent=11 // pred_check_branch
          %226 = sbr.rel (%p224) target = $region36
        $region35: #{tpu_custom_call.1} parent=11 // pred_region
          _
        $region36: #{tpu_custom_call.1} parent=11 // pred_fallthru
          _
      $region12: #{tpu_custom_call.1} parent=5 // pred_fallthru
        _
      %p227 = scmp.lt.s32.totalorder %s16, 2
      // Predicated region
      $region37: #{tpu_custom_call.1} parent=5 // pred_check
        %p228 = pneg %p227
      $region38: #{tpu_custom_call.1} parent=5 // pred_check_branch
        %230 = sbr.rel (%p228) target = $region40
      $region39: #{tpu_custom_call.1} parent=5 // pred_region
        // Predicated region
        $region41: #{tpu_custom_call.1} parent=39 // pred_check
          %p231 = pneg %p36
        $region42: #{tpu_custom_call.1} parent=39 // pred_check_branch
          %233 = sbr.rel (%p231) target = $region44
        $region43: #{tpu_custom_call.1} parent=39 // pred_region
          %p234 = scmp.lt.s32.totalorder %s16, 1
          %s235 = scalar_select %p234, %s16, 1
          %s236 = smul.addr %s235, 3
          %s237 = smul.addr %s236, 8
          %s238 = scalar_lea.vmem %s0, %s237
        $region44: #{tpu_custom_call.1} parent=39 // pred_fallthru
          _
      $region40: #{tpu_custom_call.1} parent=5 // pred_fallthru
        _
      %p239 = scmp.le.s32.totalorder 1, %s16
      %p240 = scmp.lt.s32.totalorder %s16, 3
      %p241 = pnand %p239, %p240
      %p242 = pneg %p241
      // Predicated region
      $region45: #{tpu_custom_call.1} parent=5 // pred_check
        _
      $region46: #{tpu_custom_call.1} parent=5 // pred_check_branch
        %244 = sbr.rel (%p241) target = $region48
      $region47: #{tpu_custom_call.1} parent=5 // pred_region
        %s245 = ssub.s32 %s16, 1
        %p246 = scmp.lt.s32.totalorder %s21, 1
        %s247 = scalar_select %p246, %s21, 1
        %s248 = smul.addr %s247, 3
        %s249 = smul.addr %s248, 8
        %s250 = scalar_lea.vmem %s0, %s249
        %p251 = pneg %p42
        %p252 = pneg %p39
        %p253 = pneg %p63
        %p254 = pneg %p60
        %p255 = pneg %p84
        %p256 = pneg %p81
        %p257 = pneg %p105
        %p258 = pneg %p102
        %p259 = pneg %p126
        %p260 = pneg %p123
        %p261 = pneg %p147
        %p262 = pneg %p144
        %p263 = pneg %p168
        %p264 = pneg %p165
        %p265 = pneg %p194
        %p266 = pneg %p191
        %s267 = sand.u32 %s181, 1
        %s268 = scalar_lea.sflag [#allocation4], %s267
        %s269 = sand.u32 %s181, 1
        %s270 = smul.addr %s269, 8
        %s271 = scalar_lea.vmem [#allocation3], %s270
        %p272 = scmp.lt.s32.totalorder %s21, 1
        %s273 = scalar_select %p272, %s21, 1
        %s274 = smul.addr %s273, 3
        %s275 = smul.addr %s274, 8
        %s276 = scalar_lea.vmem %s0, %s275
        %v278 = vld [vmem:[%s276] sm:$0xff]
        %v279 = vld [vmem:[%s276 + $0x8] sm:$0xff]
        %v280 = vld [vmem:[%s276 + $0x10] sm:$0x3]
        %v281 = vmax.f32 %v278, 0.0
        %v282 = vmax.f32 %v279, 0.0
        %v283 = vmax.f32 %v280, 0.0
        %v284 = vpack.c.bf16 %v282, %v281
        %v285 = vld [vmem:[%s1] sm:$0xf]
        %v286 = vld [vmem:[%s1 + $0x4] sm:$0xf]
        %v287 = vld [vmem:[%s1 + $0x8] sm:$0xf]
        %v288 = vld [vmem:[%s1 + $0xc] sm:$0xf]
        %v289 = vld [vmem:[%s1 + $0x10] sm:$0xf]
        %v290 = vld [vmem:[%s1 + $0x14] sm:$0xf]
        %v291 = vld [vmem:[%s1 + $0x18] sm:$0xf]
        %v292 = vld [vmem:[%s1 + $0x1c] sm:$0xf]
        %v293 = vld [vmem:[%s1 + $0x20] sm:$0xf]
        %v294 = vpack.c.bf16 %v283, %v283
        %s295 = scalar_lea.vmem %s1, 36
        %v296 = vld [vmem:[%s295] sm:$0xf]
        %v297 = vld [vmem:[%s295 + $0x4] sm:$0xf]
        %v298 = vld [vmem:[%s295 + $0x8] sm:$0xf]
        %v299 = vld [vmem:[%s295 + $0xc] sm:$0xf]
        %v300 = vld [vmem:[%s295 + $0x10] sm:$0xf]
        %v301 = vld [vmem:[%s295 + $0x14] sm:$0xf]
        %v302 = vld [vmem:[%s295 + $0x18] sm:$0xf]
        %v303 = vld [vmem:[%s295 + $0x1c] sm:$0xf]
        %v304 = vld [vmem:[%s295 + $0x20] sm:$0xf]
        %vm305 = vsmask.f32 7424
        %v307 = vshrl.u32 %v284, 16
        %v309 = vshll.u32 %v284, 16
        %v311 = vrot.slane %v309, 1
        %v312 = vor.u32 %v307, %v311
        %v314 = vshll.u32 %v294, 16
        %v316 = vrot.slane %v314, 1
        %v317 = vsel %vm305, %v312, %v316
        %v327 = vunpack.c.l.b16 %v296
        %v328 = vunpack.c.l.b16 %v297
        %v329 = vunpack.c.l.b16 %v298
        %v330 = vunpack.c.l.b16 %v299
        %v331 = vunpack.c.l.b16 %v300
        %v332 = vunpack.c.l.b16 %v301
        %v333 = vunpack.c.l.b16 %v302
        %v334 = vunpack.c.l.b16 %v303
        %v335 = vunpack.c.l.b16 %v304
        %v336 = vpack.c.b16 %v328, %v327
        %v337 = vpack.c.b16 %v330, %v329
        %v338 = vpack.c.b16 %v332, %v331
        %v339 = vpack.c.b16 %v334, %v333
        %v340 = vpack.c.b16 %v335, %v335
        %vm345 = vcmask 588800
        %v347 = vsel %vm345, %v317, 0
        %vm349 = vcmask 1043456
        %v351 = vsel %vm349, %v340, 0
        %353 = vmatprep.subr.bf16.mxu0 0
        %354 = vmatpush1.bf16.msra.mxu0 %v336
        %355 = vmatprep.subr.bf16.mxu0 0
        %356 = vmatpush1.bf16.msra.mxu0 %v337
        %357 = vmatprep.subr.bf16.mxu0 0
        %358 = vmatpush1.bf16.msra.mxu0 %v338
        %359 = vmatprep.subr.bf16.mxu0 0
        %360 = vmatpush1.bf16.msra.mxu0 %v339
        %361 = vmatprep.subr.bf16.mxu0 0
        %362 = vmatpush1.bf16.msra.mxu0 %v351
        %363 = vmatprep.subr.bf16.mxu0 0
        %364 = vmatpush1.bf16.msra.mxu0 0
        %365 = vmatprep.subr.bf16.mxu0 0
        %366 = vmatpush1.bf16.msra.mxu0 0
        %367 = vmatprep.subr.bf16.mxu0 0
        %368 = vmatpush1.bf16.msra.mxu0 0
        %369 = vmatprep.subr.bf16.mxu0 0
        %370 = vmatpush1.bf16.msra.mxu0 0
        %371 = vmatprep.subr.bf16.mxu0 0
        %372 = vmatpush1.bf16.msra.mxu0 0
        %373 = vmatprep.subr.bf16.mxu0 0
        %374 = vmatpush1.bf16.msra.mxu0 0
        %375 = vmatprep.subr.bf16.mxu0 0
        %376 = vmatpush1.bf16.msra.mxu0 0
        %377 = vmatprep.subr.bf16.mxu0 0
        %378 = vmatpush1.bf16.msra.mxu0 0
        %379 = vmatprep.subr.bf16.mxu0 0
        %380 = vmatpush1.bf16.msra.mxu0 0
        %381 = vmatprep.subr.bf16.mxu0 0
        %382 = vmatpush1.bf16.msra.mxu0 0
        %383 = vmatprep.subr.bf16.mxu0 0
        %384 = vmatpush1.bf16.msra.mxu0 0
        %385 = vmatprep.mubr.bf16.mxu0 0
        %386 = vmatmul.mubr.bf16.gmra.mrb[0].mxu0 %v347
        %v387 = vpop.f32.mrb[0].mxu0
        %v388 = vadd.f32 0.0, %v387
        %v389 = vpop.f32.mrb[0].mxu0
        %v390 = vpop.f32.mrb[0].mxu0
        %v391 = vadd.f32 0.0, %v390
        %v392 = vpop.f32.mrb[0].mxu0
        %393 = vdwg.mxu0
        %v403 = vunpack.c.l.b16 %v285
        %v404 = vunpack.c.l.b16 %v286
        %v405 = vunpack.c.l.b16 %v287
        %v406 = vunpack.c.l.b16 %v288
        %v407 = vunpack.c.l.b16 %v289
        %v408 = vunpack.c.l.b16 %v290
        %v409 = vunpack.c.l.b16 %v291
        %v410 = vunpack.c.l.b16 %v292
        %v411 = vunpack.c.l.b16 %v293
        %v412 = vpack.c.b16 %v404, %v403
        %v413 = vpack.c.b16 %v406, %v405
        %v414 = vpack.c.b16 %v408, %v407
        %v415 = vpack.c.b16 %v410, %v409
        %v416 = vpack.c.b16 %v411, %v411
        %v421 = vsel %vm345, %v284, 0
        %v424 = vsel %vm349, %v416, 0
        %426 = vmatprep.subr.bf16.mxu0 0
        %427 = vmatpush1.bf16.msra.mxu0 %v412
        %428 = vmatprep.subr.bf16.mxu0 0
        %429 = vmatpush1.bf16.msra.mxu0 %v413
        %430 = vmatprep.subr.bf16.mxu0 0
        %431 = vmatpush1.bf16.msra.mxu0 %v414
        %432 = vmatprep.subr.bf16.mxu0 0
        %433 = vmatpush1.bf16.msra.mxu0 %v415
        %434 = vmatprep.subr.bf16.mxu0 0
        %435 = vmatpush1.bf16.msra.mxu0 %v424
        %436 = vmatprep.subr.bf16.mxu0 0
        %437 = vmatpush1.bf16.msra.mxu0 0
        %438 = vmatprep.subr.bf16.mxu0 0
        %439 = vmatpush1.bf16.msra.mxu0 0
        %440 = vmatprep.subr.bf16.mxu0 0
        %441 = vmatpush1.bf16.msra.mxu0 0
        %442 = vmatprep.subr.bf16.mxu0 0
        %443 = vmatpush1.bf16.msra.mxu0 0
        %444 = vmatprep.subr.bf16.mxu0 0
        %445 = vmatpush1.bf16.msra.mxu0 0
        %446 = vmatprep.subr.bf16.mxu0 0
        %447 = vmatpush1.bf16.msra.mxu0 0
        %448 = vmatprep.subr.bf16.mxu0 0
        %449 = vmatpush1.bf16.msra.mxu0 0
        %450 = vmatprep.subr.bf16.mxu0 0
        %451 = vmatpush1.bf16.msra.mxu0 0
        %452 = vmatprep.subr.bf16.mxu0 0
        %453 = vmatpush1.bf16.msra.mxu0 0
        %454 = vmatprep.subr.bf16.mxu0 0
        %455 = vmatpush1.bf16.msra.mxu0 0
        %456 = vmatprep.subr.bf16.mxu0 0
        %457 = vmatpush1.bf16.msra.mxu0 0
        %458 = vmatprep.mubr.bf16.mxu0 0
        %459 = vmatmul.mubr.bf16.gmra.mrb[0].mxu0 %v421
        %v460 = vpop.f32.mrb[0].mxu0
        %v461 = vadd.f32 %v388, %v460
        %v462 = vpop.f32.mrb[0].mxu0
        %v463 = vpop.f32.mrb[0].mxu0
        %v464 = vadd.f32 %v391, %v463
        %v465 = vpop.f32.mrb[0].mxu0
        %466 = vdwg.mxu0
        %s467 = scalar_lea.vmem %s1, 72
        %v468 = vld [vmem:[%s467] sm:$0xf]
        %v469 = vld [vmem:[%s467 + $0x4] sm:$0xf]
        %v470 = vld [vmem:[%s467 + $0x8] sm:$0xf]
        %v471 = vld [vmem:[%s467 + $0xc] sm:$0xf]
        %v472 = vld [vmem:[%s467 + $0x10] sm:$0xf]
        %v473 = vld [vmem:[%s467 + $0x14] sm:$0xf]
        %v474 = vld [vmem:[%s467 + $0x18] sm:$0xf]
        %v475 = vld [vmem:[%s467 + $0x1c] sm:$0xf]
        %v476 = vld [vmem:[%s467 + $0x20] sm:$0xf]
        %vm479 = vcmask 1046528
        %v480 = vrot.slane %v284, 1
        %v481 = vrot.slane %v294, 1
        %v482 = vsel %vm479, %v480, %v481
        %v492 = vunpack.c.l.b16 %v468
        %v493 = vunpack.c.l.b16 %v469
        %v494 = vunpack.c.l.b16 %v470
        %v495 = vunpack.c.l.b16 %v471
        %v496 = vunpack.c.l.b16 %v472
        %v497 = vunpack.c.l.b16 %v473
        %v498 = vunpack.c.l.b16 %v474
        %v499 = vunpack.c.l.b16 %v475
        %v500 = vunpack.c.l.b16 %v476
        %v501 = vpack.c.b16 %v493, %v492
        %v502 = vpack.c.b16 %v495, %v494
        %v503 = vpack.c.b16 %v497, %v496
        %v504 = vpack.c.b16 %v499, %v498
        %v505 = vpack.c.b16 %v500, %v500
        %v511 = vsel %vm345, %v482, 0
        %v514 = vsel %vm349, %v505, 0
        %516 = vmatprep.subr.bf16.mxu0 0
        %517 = vmatpush1.bf16.msra.mxu0 %v501
        %518 = vmatprep.subr.bf16.mxu0 0
        %519 = vmatpush1.bf16.msra.mxu0 %v502
        %520 = vmatprep.subr.bf16.mxu0 0
        %521 = vmatpush1.bf16.msra.mxu0 %v503
        %522 = vmatprep.subr.bf16.mxu0 0
        %523 = vmatpush1.bf16.msra.mxu0 %v504
        %524 = vmatprep.subr.bf16.mxu0 0
        %525 = vmatpush1.bf16.msra.mxu0 %v514
        %526 = vmatprep.subr.bf16.mxu0 0
        %527 = vmatpush1.bf16.msra.mxu0 0
        %528 = vmatprep.subr.bf16.mxu0 0
        %529 = vmatpush1.bf16.msra.mxu0 0
        %530 = vmatprep.subr.bf16.mxu0 0
        %531 = vmatpush1.bf16.msra.mxu0 0
        %532 = vmatprep.subr.bf16.mxu0 0
        %533 = vmatpush1.bf16.msra.mxu0 0
        %534 = vmatprep.subr.bf16.mxu0 0
        %535 = vmatpush1.bf16.msra.mxu0 0
        %536 = vmatprep.subr.bf16.mxu0 0
        %537 = vmatpush1.bf16.msra.mxu0 0
        %538 = vmatprep.subr.bf16.mxu0 0
        %539 = vmatpush1.bf16.msra.mxu0 0
        %540 = vmatprep.subr.bf16.mxu0 0
        %541 = vmatpush1.bf16.msra.mxu0 0
        %542 = vmatprep.subr.bf16.mxu0 0
        %543 = vmatpush1.bf16.msra.mxu0 0
        %544 = vmatprep.subr.bf16.mxu0 0
        %545 = vmatpush1.bf16.msra.mxu0 0
        %546 = vmatprep.subr.bf16.mxu0 0
        %547 = vmatpush1.bf16.msra.mxu0 0
        %548 = vmatprep.mubr.bf16.mxu0 0
        %549 = vmatmul.mubr.bf16.gmra.mrb[0].mxu0 %v511
        %v550 = vpop.f32.mrb[0].mxu0
        %v551 = vadd.f32 0.0, %v550
        %v552 = vpop.f32.mrb[0].mxu0
        %v553 = vpop.f32.mrb[0].mxu0
        %v554 = vadd.f32 0.0, %v553
        %v555 = vpop.f32.mrb[0].mxu0
        %556 = vdwg.mxu0
        %v557 = vadd.f32 %v461, %v551
        %v558 = vadd.f32 %v464, %v554
        %v559 = vld [vmem:[%s2] sm:$0x1]
        %v561 = vlaneseq
        %v562 = vshrl.u32 %v561, 7
        %v563 = vsub.s32 0, %v562
        %v564 = vrot.slane %v559, %v563
        %v566 = vadd.f32 %v557, %v564
        %v567 = vadd.f32 %v558, %v564
        %v568 = vmax.f32 %v566, 0.0
        %v569 = vmax.f32 %v567, 0.0
        %vm570 = vcmask 581632
        %571 = vst.msk [vmem:[#allocation2] sm:$0x1] %vm570, 0.0
        %572 = vst.msk [vmem:[#allocation2 + $0x11] sm:$0x1] %vm570, 0.0
        %573 = vst.msk [vmem:[#allocation2 + $0x1] sm:$0xff] %vm345, %v568
        %574 = vst.msk [vmem:[#allocation2 + $0x9] sm:$0xff] %vm345, %v569
        %v575 = vld [vmem:[#allocation2] sm:$0xff]
        %v576 = vld [vmem:[#allocation2 + $0x8] sm:$0xff]
        %v577 = vld [vmem:[#allocation2 + $0x10] sm:$0x3]
        %v578 = vpack.c.bf16 %v576, %v575
        %v579 = vld [vmem:[%s3] sm:$0xf]
        %v580 = vld [vmem:[%s3 + $0x4] sm:$0xf]
        %v581 = vld [vmem:[%s3 + $0x8] sm:$0xf]
        %v582 = vld [vmem:[%s3 + $0xc] sm:$0xf]
        %v583 = vld [vmem:[%s3 + $0x10] sm:$0xf]
        %v584 = vld [vmem:[%s3 + $0x14] sm:$0xf]
        %v585 = vld [vmem:[%s3 + $0x18] sm:$0xf]
        %v586 = vld [vmem:[%s3 + $0x1c] sm:$0xf]
        %v587 = vld [vmem:[%s3 + $0x20] sm:$0xf]
        %v588 = vpack.c.bf16 %v577, %v577
        %s589 = scalar_lea.vmem %s3, 36
        %v590 = vld [vmem:[%s589] sm:$0xf]
        %v591 = vld [vmem:[%s589 + $0x4] sm:$0xf]
        %v592 = vld [vmem:[%s589 + $0x8] sm:$0xf]
        %v593 = vld [vmem:[%s589 + $0xc] sm:$0xf]
        %v594 = vld [vmem:[%s589 + $0x10] sm:$0xf]
        %v595 = vld [vmem:[%s589 + $0x14] sm:$0xf]
        %v596 = vld [vmem:[%s589 + $0x18] sm:$0xf]
        %v597 = vld [vmem:[%s589 + $0x1c] sm:$0xf]
        %v598 = vld [vmem:[%s589 + $0x20] sm:$0xf]
        %v600 = vshrl.u32 %v578, 16
        %v602 = vshll.u32 %v578, 16
        %v604 = vrot.slane %v602, 1
        %v605 = vor.u32 %v600, %v604
        %v607 = vshll.u32 %v588, 16
        %v609 = vrot.slane %v607, 1
        %v610 = vsel %vm305, %v605, %v609
        %v620 = vunpack.c.l.b16 %v590
        %v621 = vunpack.c.l.b16 %v591
        %v622 = vunpack.c.l.b16 %v592
        %v623 = vunpack.c.l.b16 %v593
        %v624 = vunpack.c.l.b16 %v594
        %v625 = vunpack.c.l.b16 %v595
        %v626 = vunpack.c.l.b16 %v596
        %v627 = vunpack.c.l.b16 %v597
        %v628 = vunpack.c.l.b16 %v598
        %v629 = vpack.c.b16 %v621, %v620
        %v630 = vpack.c.b16 %v623, %v622
        %v631 = vpack.c.b16 %v625, %v624
        %v632 = vpack.c.b16 %v627, %v626
        %v633 = vpack.c.b16 %v628, %v628
        %v639 = vsel %vm345, %v610, 0
        %v642 = vsel %vm349, %v633, 0
        %644 = vmatprep.subr.bf16.mxu0 0
        %645 = vmatpush1.bf16.msra.mxu0 %v629
        %646 = vmatprep.subr.bf16.mxu0 0
        %647 = vmatpush1.bf16.msra.mxu0 %v630
        %648 = vmatprep.subr.bf16.mxu0 0
        %649 = vmatpush1.bf16.msra.mxu0 %v631
        %650 = vmatprep.subr.bf16.mxu0 0
        %651 = vmatpush1.bf16.msra.mxu0 %v632
        %652 = vmatprep.subr.bf16.mxu0 0
        %653 = vmatpush1.bf16.msra.mxu0 %v642
        %654 = vmatprep.subr.bf16.mxu0 0
        %655 = vmatpush1.bf16.msra.mxu0 0
        %656 = vmatprep.subr.bf16.mxu0 0
        %657 = vmatpush1.bf16.msra.mxu0 0
        %658 = vmatprep.subr.bf16.mxu0 0
        %659 = vmatpush1.bf16.msra.mxu0 0
        %660 = vmatprep.subr.bf16.mxu0 0
        %661 = vmatpush1.bf16.msra.mxu0 0
        %662 = vmatprep.subr.bf16.mxu0 0
        %663 = vmatpush1.bf16.msra.mxu0 0
        %664 = vmatprep.subr.bf16.mxu0 0
        %665 = vmatpush1.bf16.msra.mxu0 0
        %666 = vmatprep.subr.bf16.mxu0 0
        %667 = vmatpush1.bf16.msra.mxu0 0
        %668 = vmatprep.subr.bf16.mxu0 0
        %669 = vmatpush1.bf16.msra.mxu0 0
        %670 = vmatprep.subr.bf16.mxu0 0
        %671 = vmatpush1.bf16.msra.mxu0 0
        %672 = vmatprep.subr.bf16.mxu0 0
        %673 = vmatpush1.bf16.msra.mxu0 0
        %674 = vmatprep.subr.bf16.mxu0 0
        %675 = vmatpush1.bf16.msra.mxu0 0
        %676 = vmatprep.mubr.bf16.mxu0 0
        %677 = vmatmul.mubr.bf16.gmra.mrb[0].mxu0 %v639
        %v678 = vpop.f32.mrb[0].mxu0
        %v679 = vadd.f32 0.0, %v678
        %v680 = vpop.f32.mrb[0].mxu0
        %v681 = vpop.f32.mrb[0].mxu0
        %v682 = vadd.f32 0.0, %v681
        %v683 = vpop.f32.mrb[0].mxu0
        %684 = vdwg.mxu0
        %v694 = vunpack.c.l.b16 %v579
        %v695 = vunpack.c.l.b16 %v580
        %v696 = vunpack.c.l.b16 %v581
        %v697 = vunpack.c.l.b16 %v582
        %v698 = vunpack.c.l.b16 %v583
        %v699 = vunpack.c.l.b16 %v584
        %v700 = vunpack.c.l.b16 %v585
        %v701 = vunpack.c.l.b16 %v586
        %v702 = vunpack.c.l.b16 %v587
        %v703 = vpack.c.b16 %v695, %v694
        %v704 = vpack.c.b16 %v697, %v696
        %v705 = vpack.c.b16 %v699, %v698
        %v706 = vpack.c.b16 %v701, %v700
        %v707 = vpack.c.b16 %v702, %v702
        %v712 = vsel %vm345, %v578, 0
        %v715 = vsel %vm349, %v707, 0
        %717 = vmatprep.subr.bf16.mxu0 0
        %718 = vmatpush1.bf16.msra.mxu0 %v703
        %719 = vmatprep.subr.bf16.mxu0 0
        %720 = vmatpush1.bf16.msra.mxu0 %v704
        %721 = vmatprep.subr.bf16.mxu0 0
        %722 = vmatpush1.bf16.msra.mxu0 %v705
        %723 = vmatprep.subr.bf16.mxu0 0
        %724 = vmatpush1.bf16.msra.mxu0 %v706
        %725 = vmatprep.subr.bf16.mxu0 0
        %726 = vmatpush1.bf16.msra.mxu0 %v715
        %727 = vmatprep.subr.bf16.mxu0 0
        %728 = vmatpush1.bf16.msra.mxu0 0
        %729 = vmatprep.subr.bf16.mxu0 0
        %730 = vmatpush1.bf16.msra.mxu0 0
        %731 = vmatprep.subr.bf16.mxu0 0
        %732 = vmatpush1.bf16.msra.mxu0 0
        %733 = vmatprep.subr.bf16.mxu0 0
        %734 = vmatpush1.bf16.msra.mxu0 0
        %735 = vmatprep.subr.bf16.mxu0 0
        %736 = vmatpush1.bf16.msra.mxu0 0
        %737 = vmatprep.subr.bf16.mxu0 0
        %738 = vmatpush1.bf16.msra.mxu0 0
        %739 = vmatprep.subr.bf16.mxu0 0
        %740 = vmatpush1.bf16.msra.mxu0 0
        %741 = vmatprep.subr.bf16.mxu0 0
        %742 = vmatpush1.bf16.msra.mxu0 0
        %743 = vmatprep.subr.bf16.mxu0 0
        %744 = vmatpush1.bf16.msra.mxu0 0
        %745 = vmatprep.subr.bf16.mxu0 0
        %746 = vmatpush1.bf16.msra.mxu0 0
        %747 = vmatprep.subr.bf16.mxu0 0
        %748 = vmatpush1.bf16.msra.mxu0 0
        %749 = vmatprep.mubr.bf16.mxu0 0
        %750 = vmatmul.mubr.bf16.gmra.mrb[0].mxu0 %v712
        %v751 = vpop.f32.mrb[0].mxu0
        %v752 = vadd.f32 %v679, %v751
        %v753 = vpop.f32.mrb[0].mxu0
        %v754 = vpop.f32.mrb[0].mxu0
        %v755 = vadd.f32 %v682, %v754
        %v756 = vpop.f32.mrb[0].mxu0
        %757 = vdwg.mxu0
        %s758 = scalar_lea.vmem %s3, 72
        %v759 = vld [vmem:[%s758] sm:$0xf]
        %v760 = vld [vmem:[%s758 + $0x4] sm:$0xf]
        %v761 = vld [vmem:[%s758 + $0x8] sm:$0xf]
        %v762 = vld [vmem:[%s758 + $0xc] sm:$0xf]
        %v763 = vld [vmem:[%s758 + $0x10] sm:$0xf]
        %v764 = vld [vmem:[%s758 + $0x14] sm:$0xf]
        %v765 = vld [vmem:[%s758 + $0x18] sm:$0xf]
        %v766 = vld [vmem:[%s758 + $0x1c] sm:$0xf]
        %v767 = vld [vmem:[%s758 + $0x20] sm:$0xf]
        %v770 = vrot.slane %v578, 1
        %v771 = vrot.slane %v588, 1
        %v772 = vsel %vm479, %v770, %v771
        %v782 = vunpack.c.l.b16 %v759
        %v783 = vunpack.c.l.b16 %v760
        %v784 = vunpack.c.l.b16 %v761
        %v785 = vunpack.c.l.b16 %v762
        %v786 = vunpack.c.l.b16 %v763
        %v787 = vunpack.c.l.b16 %v764
        %v788 = vunpack.c.l.b16 %v765
        %v789 = vunpack.c.l.b16 %v766
        %v790 = vunpack.c.l.b16 %v767
        %v791 = vpack.c.b16 %v783, %v782
        %v792 = vpack.c.b16 %v785, %v784
        %v793 = vpack.c.b16 %v787, %v786
        %v794 = vpack.c.b16 %v789, %v788
        %v795 = vpack.c.b16 %v790, %v790
        %v801 = vsel %vm345, %v772, 0
        %v804 = vsel %vm349, %v795, 0
        %806 = vmatprep.subr.bf16.mxu0 0
        %807 = vmatpush1.bf16.msra.mxu0 %v791
        %808 = vmatprep.subr.bf16.mxu0 0
        %809 = vmatpush1.bf16.msra.mxu0 %v792
        %810 = vmatprep.subr.bf16.mxu0 0
        %811 = vmatpush1.bf16.msra.mxu0 %v793
        %812 = vmatprep.subr.bf16.mxu0 0
        %813 = vmatpush1.bf16.msra.mxu0 %v794
        %814 = vmatprep.subr.bf16.mxu0 0
        %815 = vmatpush1.bf16.msra.mxu0 %v804
        %816 = vmatprep.subr.bf16.mxu0 0
        %817 = vmatpush1.bf16.msra.mxu0 0
        %818 = vmatprep.subr.bf16.mxu0 0
        %819 = vmatpush1.bf16.msra.mxu0 0
        %820 = vmatprep.subr.bf16.mxu0 0
        %821 = vmatpush1.bf16.msra.mxu0 0
        %822 = vmatprep.subr.bf16.mxu0 0
        %823 = vmatpush1.bf16.msra.mxu0 0
        %824 = vmatprep.subr.bf16.mxu0 0
        %825 = vmatpush1.bf16.msra.mxu0 0
        %826 = vmatprep.subr.bf16.mxu0 0
        %827 = vmatpush1.bf16.msra.mxu0 0
        %828 = vmatprep.subr.bf16.mxu0 0
        %829 = vmatpush1.bf16.msra.mxu0 0
        %830 = vmatprep.subr.bf16.mxu0 0
        %831 = vmatpush1.bf16.msra.mxu0 0
        %832 = vmatprep.subr.bf16.mxu0 0
        %833 = vmatpush1.bf16.msra.mxu0 0
        %834 = vmatprep.subr.bf16.mxu0 0
        %835 = vmatpush1.bf16.msra.mxu0 0
        %836 = vmatprep.subr.bf16.mxu0 0
        %837 = vmatpush1.bf16.msra.mxu0 0
        %838 = vmatprep.mubr.bf16.mxu0 0
        %839 = vmatmul.mubr.bf16.gmra.mrb[0].mxu0 %v801
        %v840 = vpop.f32.mrb[0].mxu0
        %v841 = vadd.f32 0.0, %v840
        %v842 = vpop.f32.mrb[0].mxu0
        %v843 = vpop.f32.mrb[0].mxu0
        %v844 = vadd.f32 0.0, %v843
        %v845 = vpop.f32.mrb[0].mxu0
        %846 = vdwg.mxu0
        %v847 = vadd.f32 %v752, %v841
        %v848 = vadd.f32 %v755, %v844
        %v849 = vpack.c.bf16 %v279, %v278
        %v850 = vpack.c.bf16 %v280, %v280
        %v851 = vld [vmem:[%s4] sm:$0xf]
        %v852 = vld [vmem:[%s4 + $0x4] sm:$0xf]
        %v853 = vld [vmem:[%s4 + $0x8] sm:$0xf]
        %v854 = vld [vmem:[%s4 + $0xc] sm:$0xf]
        %v855 = vld [vmem:[%s4 + $0x10] sm:$0xf]
        %v856 = vld [vmem:[%s4 + $0x14] sm:$0xf]
        %v857 = vld [vmem:[%s4 + $0x18] sm:$0xf]
        %v858 = vld [vmem:[%s4 + $0x1c] sm:$0xf]
        %v859 = vld [vmem:[%s4 + $0x20] sm:$0xf]
        %v861 = vshrl.u32 %v849, 16
        %v863 = vshll.u32 %v849, 16
        %v865 = vrot.slane %v863, 1
        %v866 = vor.u32 %v861, %v865
        %v868 = vshll.u32 %v850, 16
        %v870 = vrot.slane %v868, 1
        %v871 = vsel %vm305, %v866, %v870
        %v881 = vunpack.c.l.b16 %v851
        %v882 = vunpack.c.l.b16 %v852
        %v883 = vunpack.c.l.b16 %v853
        %v884 = vunpack.c.l.b16 %v854
        %v885 = vunpack.c.l.b16 %v855
        %v886 = vunpack.c.l.b16 %v856
        %v887 = vunpack.c.l.b16 %v857
        %v888 = vunpack.c.l.b16 %v858
        %v889 = vunpack.c.l.b16 %v859
        %v890 = vpack.c.b16 %v882, %v881
        %v891 = vpack.c.b16 %v884, %v883
        %v892 = vpack.c.b16 %v886, %v885
        %v893 = vpack.c.b16 %v888, %v887
        %v894 = vpack.c.b16 %v889, %v889
        %v900 = vsel %vm345, %v871, 0
        %v903 = vsel %vm349, %v894, 0
        %905 = vmatprep.subr.bf16.mxu0 0
        %906 = vmatpush1.bf16.msra.mxu0 %v890
        %907 = vmatprep.subr.bf16.mxu0 0
        %908 = vmatpush1.bf16.msra.mxu0 %v891
        %909 = vmatprep.subr.bf16.mxu0 0
        %910 = vmatpush1.bf16.msra.mxu0 %v892
        %911 = vmatprep.subr.bf16.mxu0 0
        %912 = vmatpush1.bf16.msra.mxu0 %v893
        %913 = vmatprep.subr.bf16.mxu0 0
        %914 = vmatpush1.bf16.msra.mxu0 %v903
        %915 = vmatprep.subr.bf16.mxu0 0
        %916 = vmatpush1.bf16.msra.mxu0 0
        %917 = vmatprep.subr.bf16.mxu0 0
        %918 = vmatpush1.bf16.msra.mxu0 0
        %919 = vmatprep.subr.bf16.mxu0 0
        %920 = vmatpush1.bf16.msra.mxu0 0
        %921 = vmatprep.subr.bf16.mxu0 0
        %922 = vmatpush1.bf16.msra.mxu0 0
        %923 = vmatprep.subr.bf16.mxu0 0
        %924 = vmatpush1.bf16.msra.mxu0 0
        %925 = vmatprep.subr.bf16.mxu0 0
        %926 = vmatpush1.bf16.msra.mxu0 0
        %927 = vmatprep.subr.bf16.mxu0 0
        %928 = vmatpush1.bf16.msra.mxu0 0
        %929 = vmatprep.subr.bf16.mxu0 0
        %930 = vmatpush1.bf16.msra.mxu0 0
        %931 = vmatprep.subr.bf16.mxu0 0
        %932 = vmatpush1.bf16.msra.mxu0 0
        %933 = vmatprep.subr.bf16.mxu0 0
        %934 = vmatpush1.bf16.msra.mxu0 0
        %935 = vmatprep.subr.bf16.mxu0 0
        %936 = vmatpush1.bf16.msra.mxu0 0
        %937 = vmatprep.mubr.bf16.mxu0 0
        %938 = vmatmul.mubr.bf16.gmra.mrb[0].mxu0 %v900
        %v939 = vpop.f32.mrb[0].mxu0
        %v940 = vadd.f32 0.0, %v939
        %v941 = vpop.f32.mrb[0].mxu0
        %v942 = vpop.f32.mrb[0].mxu0
        %v943 = vadd.f32 0.0, %v942
        %v944 = vpop.f32.mrb[0].mxu0
        %945 = vdwg.mxu0
        %v946 = vadd.f32 %v847, %v940
        %v947 = vadd.f32 %v848, %v943
        %v948 = vld [vmem:[%s5] sm:$0xff]
        %v949 = vld [vmem:[%s6] sm:$0x1]
        %v951 = vlaneseq
        %v952 = vshrl.u32 %v951, 7
        %v953 = vsub.s32 0, %v952
        %v954 = vrot.slane %v949, %v953
        %vm956 = vcmask 130048
        %v958 = vsel %vm956, %v948, 0
        %960 = vmatprep.subr.mxu0 0.0
        %961 = vmatpush1.msra.mxu0 %v946
        %962 = vmatprep.subr.mxu0 0.0
        %963 = vmatpush1.msra.mxu0 %v947
        %964 = vmatprep.subr.mxu0 0.0
        %965 = vmatpush1.msra.mxu0 0.0
        %966 = vmatprep.subr.mxu0 0.0
        %967 = vmatpush1.msra.mxu0 0.0
        %968 = vmatprep.subr.mxu0 0.0
        %969 = vmatpush1.msra.mxu0 0.0
        %970 = vmatprep.subr.mxu0 0.0
        %971 = vmatpush1.msra.mxu0 0.0
        %972 = vmatprep.subr.mxu0 0.0
        %973 = vmatpush1.msra.mxu0 0.0
        %974 = vmatprep.subr.mxu0 0.0
        %975 = vmatpush1.msra.mxu0 0.0
        %976 = vmatprep.subr.mxu0 0.0
        %977 = vmatpush1.msra.mxu0 0.0
        %978 = vmatprep.subr.mxu0 0.0
        %979 = vmatpush1.msra.mxu0 0.0
        %980 = vmatprep.subr.mxu0 0.0
        %981 = vmatpush1.msra.mxu0 0.0
        %982 = vmatprep.subr.mxu0 0.0
        %983 = vmatpush1.msra.mxu0 0.0
        %984 = vmatprep.subr.mxu0 0.0
        %985 = vmatpush1.msra.mxu0 0.0
        %986 = vmatprep.subr.mxu0 0.0
        %987 = vmatpush1.msra.mxu0 0.0
        %988 = vmatprep.subr.mxu0 0.0
        %989 = vmatpush1.msra.mxu0 0.0
        %990 = vmatprep.subr.mxu0 0.0
        %991 = vmatpush1.msra.mxu0 0.0
        %992 = vmatprep.subr.mxu0 0.0
        %993 = vmatpush1.msra.mxu0 0.0
        %994 = vmatprep.subr.mxu0 0.0
        %995 = vmatpush1.msra.mxu0 0.0
        %996 = vmatprep.subr.mxu0 0.0
        %997 = vmatpush1.msra.mxu0 0.0
        %998 = vmatprep.subr.mxu0 0.0
        %999 = vmatpush1.msra.mxu0 0.0
        %1000 = vmatprep.subr.mxu0 0.0
        %1001 = vmatpush1.msra.mxu0 0.0
        %1002 = vmatprep.subr.mxu0 0.0
        %1003 = vmatpush1.msra.mxu0 0.0
        %1004 = vmatprep.subr.mxu0 0.0
        %1005 = vmatpush1.msra.mxu0 0.0
        %1006 = vmatprep.subr.mxu0 0.0
        %1007 = vmatpush1.msra.mxu0 0.0
        %1008 = vmatprep.subr.mxu0 0.0
        %1009 = vmatpush1.msra.mxu0 0.0
        %1010 = vmatprep.subr.mxu0 0.0
        %1011 = vmatpush1.msra.mxu0 0.0
        %1012 = vmatprep.subr.mxu0 0.0
        %1013 = vmatpush1.msra.mxu0 0.0
        %1014 = vmatprep.subr.mxu0 0.0
        %1015 = vmatpush1.msra.mxu0 0.0
        %1016 = vmatprep.subr.mxu0 0.0
        %1017 = vmatpush1.msra.mxu0 0.0
        %1018 = vmatprep.subr.mxu0 0.0
        %1019 = vmatpush1.msra.mxu0 0.0
        %1020 = vmatprep.subr.mxu0 0.0
        %1021 = vmatpush1.msra.mxu0 0.0
        %1022 = vmatprep.subr.mxu0 0.0
        %1023 = vmatpush1.msra.mxu0 0.0
        %1024 = vmatprep.mubr.f32.mxu0 0.0
        %1025 = vmatmul.mubr.f32.gmra.mrb[0].mxu0 %v958
        %v1026 = vpop.f32.mrb[0].mxu0
        %v1027 = vadd.f32 %v954, %v1026
        %v1028 = vpop.f32.mrb[0].mxu0
        %1029 = vdwg.mxu0
        %vm1030 = vcmask 523264
        %1031 = vst.msk [vmem:[%s271] sm:$0xff] %vm1030, %v1027
        %s1032 = sand.u32 %s181, 1
        %s1033 = scalar_lea.sflag [#allocation4], %s1032
        %s1034 = sand.u32 %s181, 1
        %s1035 = smul.addr %s1034, 8
        %s1036 = scalar_lea.vmem [#allocation3], %s1035
        // Predicated region
        $region49: #{tpu_custom_call.1} parent=47 // pred_check
          %p1037 = pneg %p191
        $region50: #{tpu_custom_call.1} parent=47 // pred_check_branch
          %1039 = sbr.rel (%p1037) target = $region52
        $region51: #{tpu_custom_call.1} parent=47 // pred_region
          %s1041 = ssub.s32 128, 128
          %1042 = vsyncadd %s1033, %s1041
          %s1043 = smul.addr %s21, 128
          %s1044 = scalar_lea.hbm %s7, %s1043
          %s1046 = sshll.u32 %s1036, 4
          %s1047 = int_to_ptr.vmem [resolvable:$true] %s1046
          %1049 = dma.vmem_to_hbm [thread:$0]  %s1047, 128, %s1044, %s1033
        $region52: #{tpu_custom_call.1} parent=47 // pred_fallthru
          _
      $region48: #{tpu_custom_call.1} parent=5 // pred_fallthru
        _
      %p1050 = scmp.le.s32.totalorder 2, %s16
      // Predicated region
      $region53: #{tpu_custom_call.1} parent=5 // pred_check
        %p1051 = pneg %p1050
      $region54: #{tpu_custom_call.1} parent=5 // pred_check_branch
        %1053 = sbr.rel (%p1051) target = $region56
      $region55: #{tpu_custom_call.1} parent=5 // pred_region
        %s1054 = ssub.s32 %s16, 2
        // Predicated region
        $region57: #{tpu_custom_call.1} parent=55 // pred_check
          %p1055 = pneg %p197
        $region58: #{tpu_custom_call.1} parent=55 // pred_check_branch
          %1057 = sbr.rel (%p1055) target = $region60
        $region59: #{tpu_custom_call.1} parent=55 // pred_region
          %s1058 = sand.u32 %s182, 1
          %s1059 = scalar_lea.sflag [#allocation4], %s1058
          %s1060 = sand.u32 %s182, 1
          %s1061 = smul.addr %s1060, 8
          %s1062 = scalar_lea.vmem [#allocation3], %s1061
          %1063 = dma.done %s1059, 128
        $region60: #{tpu_custom_call.1} parent=55 // pred_fallthru
          _
      $region56: #{tpu_custom_call.1} parent=5 // pred_fallthru
        _
    $region6: #{tpu_custom_call.1} parent=1 // loop_footer
      %s20 = sadd.s32 1, %s16
    $region7: #{tpu_custom_call.1} parent=1 // loop_footer_branch
      %15 = sbr.rel target = $region3
    $region8: #{tpu_custom_call.1} parent=1 // loop_exit
      _
    %1064 = vsyncpa [#allocation4], 1
    %s1065 = scalar_lea.sflag [#allocation4], 1
    %1066 = vsyncpa %s1065, 1

</llo_original>
